<compile_context>
chip_gen: v6e
topology: v6e:2x2x1
jax: 0.10.0
libtpu: 0.0.40
codegen_flags: <defaults>
</compile_context>

<pallas_src>
import math

import jax
import jax.numpy as jnp
from jax.experimental import pallas as pl
from jax.experimental.pallas import tpu as pltpu


def fpn_kernel(x_ref, skip_ref, w_ref, b_ref, o_ref):
    # x_ref:    (1, TH,   W,  Cp)   low-res features (NHWC row tile)
    # skip_ref: (1, 2TH, 2W,  Cs)   high-res skip   (NHWC row tile)
    # w_ref:    (Cs, Cp)            1x1-conv weight (transposed)
    # b_ref:    (1, Cp)             1x1-conv bias (f32)
    # o_ref:    (1, 2TH, 2W, Cp)
    s = skip_ref[0]                                   # (2TH, 2W, Cs)
    th2, w2, cs = s.shape
    # One big lane-dense MXU matmul per step; f32 accumulate.  (Operands are
    # bf16 whenever the caller runs bf16 I/O -> native bf16 MXU path on v5e.)
    conv = jnp.dot(s.reshape(th2 * w2, cs), w_ref[...],
                   preferred_element_type=jnp.float32)
    conv = conv + b_ref[...].astype(jnp.float32)      # bias broadcast once
    conv = conv.reshape(th2, w2, conv.shape[-1])      # (2TH, 2W, Cp)

    # Nearest-neighbor 2x upsample of x, entirely in VMEM (XLU sublane work).
    x = x_ref[0].astype(jnp.float32)                  # (TH, W, Cp)
    x = jnp.repeat(x, 2, axis=1)                      # (TH, 2W, Cp)  W interleave
    x = jnp.repeat(x, 2, axis=0)                      # (2TH, 2W, Cp) H duplicate

    o_ref[0] = (conv + x).astype(o_ref.dtype)


def _vmem_capacity_bytes():
    """Physical VMEM of the current generation, with a conservative fallback."""
    try:
        cap = getattr(pltpu.get_tpu_info(), "vmem_capacity_bytes", None)
        if cap:
            return int(cap)
    except Exception:
        pass
    return 64 * 1024 * 1024   # v7x per-TensorCore VMEM (most restrictive)


def _pick_tile_rows(H, W, Cp, Cs, io_bytes, budget_bytes):
    """Rows of x per grid step so double-buffered tiles + f32 temps fit budget."""
    per_row = (2 * W * (Cp + 4 * Cs + 4 * Cp) * io_bytes   # pipelined x/skip/out
               + 12 * W * Cp * 4)                          # f32 conv + upsampled x
    th = int(budget_bytes // max(per_row, 1))
    return max(1, min(H, th))


def fpn_block_forward_nhwc(x, skip, weight, bias, *, io_dtype=None):
    """Channels-last FPN block (zero layout glue).

    x: (N, H, W, Cp), skip: (N, 2H, 2W, Cs), weight: (Cp, Cs), bias: (Cp,)
    -> (N, 2H, 2W, Cp).  io_dtype=jnp.bfloat16 halves HBM traffic (accumulate
    stays f32 inside the kernel)."""
    N, H, W, Cp = x.shape
    Ns, H2, W2, Cs = skip.shape
    assert Ns == N and H2 == 2 * H and W2 == 2 * W and weight.shape == (Cp, Cs)

    if io_dtype is not None:
        x = x.astype(io_dtype)
        skip = skip.astype(io_dtype)
    io_dt = x.dtype

    w_t = jnp.transpose(weight).astype(io_dt)          # (Cs, Cp)
    b2 = bias.reshape(1, Cp).astype(jnp.float32)

    cap = _vmem_capacity_bytes()
    io_bytes = jnp.dtype(io_dt).itemsize
    th = _pick_tile_rows(H, W, Cp, Cs, io_bytes, budget_bytes=int(0.45 * cap))
    n_tiles = pl.cdiv(H, th)
    # Keep tiny step counts even so the v7x megacore splits across both TCs.
    if N * n_tiles < 8 and (N * n_tiles) % 2 == 1 and th > 1:
        th = pl.cdiv(H, n_tiles + 1)
        n_tiles = pl.cdiv(H, th)

    vmem_limit = min(int(0.75 * cap), 96 * 1024 * 1024)

    # TODO(synk): weight/bias are tiny but still double-buffered by default;
    # pipeline_mode=pl.Buffered(1) would reclaim Cs*Cp bytes of VMEM on v7x.
    return pl.pallas_call(
        fpn_kernel,
        out_shape=jax.ShapeDtypeStruct((N, 2 * H, 2 * W, Cp), io_dt),
        grid=(N, n_tiles),
        in_specs=[
            pl.BlockSpec((1, th, W, Cp), lambda n, t: (n, t, 0, 0)),
            pl.BlockSpec((1, 2 * th, 2 * W, Cs), lambda n, t: (n, t, 0, 0)),
            pl.BlockSpec((Cs, Cp), lambda n, t: (0, 0)),
            pl.BlockSpec((1, Cp), lambda n, t: (0, 0)),
        ],
        out_specs=pl.BlockSpec((1, 2 * th, 2 * W, Cp), lambda n, t: (n, t, 0, 0)),
        compiler_params=pltpu.CompilerParams(
            dimension_semantics=("parallel", "parallel"),
            vmem_limit_bytes=vmem_limit),
    )(x, skip, w_t, b2)


def fpn_block_forward(x, skip, weight, bias, *, io_dtype=None):
    """NCHW interface matching PyTorch FPNBlock.forward.

    The NCHW<->NHWC transposes below are pure interface glue; models that keep
    activations channels-last should call fpn_block_forward_nhwc directly."""
    x_nhwc = jnp.transpose(x, (0, 2, 3, 1))
    skip_nhwc = jnp.transpose(skip, (0, 2, 3, 1))
    out_nhwc = fpn_block_forward_nhwc(x_nhwc, skip_nhwc, weight, bias,
                                      io_dtype=io_dtype)
    return jnp.transpose(out_nhwc, (0, 3, 1, 2))


def fpn_block_reference(x, skip, weight, bias):
    """Pure-JAX reference mirroring the PyTorch forward (NCHW)."""
    x_up = jnp.repeat(jnp.repeat(x, 2, axis=2), 2, axis=3)
    sc = jnp.einsum('nchw,dc->ndhw', skip, weight) + bias[None, :, None, None]
    return x_up + sc


if __name__ == "__main__":
    # Small shapes consistent with FPNBlock(pyramid_channels=8, skip_channels=4).
    N, Cp, Cs, H, W = 2, 8, 4, 8, 8

    key = jax.random.PRNGKey(0)
    k_x, k_s, k_w, k_b = jax.random.split(key, 4)
    x = jax.random.normal(k_x, (N, Cp, H, W), dtype=jnp.float32)
    skip = jax.random.normal(k_s, (N, Cs, 2 * H, 2 * W), dtype=jnp.float32)

    # Deterministic parameter init (PyTorch-style uniform bound for a 1x1 conv).
    bound = 1.0 / math.sqrt(Cs * 1 * 1)
    weight = jax.random.uniform(k_w, (Cp, Cs), minval=-bound, maxval=bound,
                                dtype=jnp.float32)
    bias = jax.random.uniform(k_b, (Cp,), minval=-bound, maxval=bound,
                              dtype=jnp.float32)

    ref = fpn_block_reference(x, skip, weight, bias)

    # f32 I/O path (tight correctness check, PyTorch-identical NCHW interface).
    out = jax.block_until_ready(jax.jit(fpn_block_forward)(x, skip, weight, bias))
    assert out.shape == (N, Cp, 2 * H, 2 * W), out.shape
    assert jnp.allclose(out, ref, atol=1e-5, rtol=1e-5), "f32 mismatch vs reference"

    # bf16 I/O path (bandwidth-optimal config), looser tolerance.
    fwd_bf16 = jax.jit(lambda *a: fpn_block_forward(*a, io_dtype=jnp.bfloat16))
    out_bf = jax.block_until_ready(fwd_bf16(x, skip, weight, bias))
    assert out_bf.dtype == jnp.bfloat16
    assert jnp.allclose(out_bf.astype(jnp.float32), ref, atol=5e-2, rtol=5e-2), \
        "bf16 mismatch vs reference"

    print("KERNEL_OK")
</pallas_src>

<mosaic_0001>
module attributes {stable_mosaic.version = 11 : i64} {
  func.func @fpn_kernel(%arg0: i32, %arg1: i32, %arg2: memref<1x8x8x8xf32, #tpu.memory_space<vmem>>, %arg3: memref<1x16x16x4xf32, #tpu.memory_space<vmem>>, %arg4: memref<4x8xf32, #tpu.memory_space<vmem>>, %arg5: memref<1x8xf32, #tpu.memory_space<vmem>>, %arg6: memref<1x16x16x8xf32, #tpu.memory_space<vmem>>) attributes {dimension_semantics = [#tpu.dimension_semantics<parallel>, #tpu.dimension_semantics<parallel>], iteration_bounds = array<i64: 2, 1>, scalar_prefetch = 0 : i64, scratch_operands = 0 : i64, tpu.core_type = #tpu.core_type<tc>, window_params = [{transform_indices = @transform_0, window_bounds = array<i64: 1, 8, 8, 8>}, {transform_indices = @transform_1, window_bounds = array<i64: 1, 16, 16, 4>}, {pipeline_mode = #tpu.pipeline_mode<synchronous>, transform_indices = @transform_2, window_bounds = array<i64: 4, 8>}, {pipeline_mode = #tpu.pipeline_mode<synchronous>, transform_indices = @transform_3, window_bounds = array<i64: 1, 8>}, {transform_indices = @transform_4, window_bounds = array<i64: 1, 16, 16, 8>}]} {
    %c0 = arith.constant 0 : index
    %c0_0 = arith.constant 0 : index
    %c0_1 = arith.constant 0 : index
    %c0_2 = arith.constant 0 : index
    %0 = vector.load %arg3[%c0, %c0_0, %c0_1, %c0_2] : memref<1x16x16x4xf32, #tpu.memory_space<vmem>>, vector<1x16x16x4xf32>
    %1 = vector.shape_cast %0 : vector<1x16x16x4xf32> to vector<16x16x4xf32>
    %2 = vector.shape_cast %1 : vector<16x16x4xf32> to vector<256x4xf32>
    %c0_3 = arith.constant 0 : index
    %c0_4 = arith.constant 0 : index
    %3 = vector.load %arg4[%c0_3, %c0_4] : memref<4x8xf32, #tpu.memory_space<vmem>>, vector<4x8xf32>
    %cst = arith.constant dense<0.000000e+00> : vector<256x8xf32>
    %4 = tpu.matmul %2, %3, %cst {dimension_numbers = #tpu.dot_dimension_numbers<[1], [0], [0], [1], [0, 0, 1, 1], [], []>} : vector<256x4xf32>, vector<4x8xf32>, vector<256x8xf32> -> vector<256x8xf32>
    %c0_5 = arith.constant 0 : index
    %c0_6 = arith.constant 0 : index
    %5 = vector.load %arg5[%c0_5, %c0_6] : memref<1x8xf32, #tpu.memory_space<vmem>>, vector<1x8xf32>
    %6 = vector.broadcast %5 : vector<1x8xf32> to vector<256x8xf32>
    %7 = arith.addf %4, %6 : vector<256x8xf32>
    %8 = vector.shape_cast %7 : vector<256x8xf32> to vector<16x16x8xf32>
    %c0_7 = arith.constant 0 : index
    %c0_8 = arith.constant 0 : index
    %c0_9 = arith.constant 0 : index
    %c0_10 = arith.constant 0 : index
    %9 = vector.load %arg2[%c0_7, %c0_8, %c0_9, %c0_10] : memref<1x8x8x8xf32, #tpu.memory_space<vmem>>, vector<1x8x8x8xf32>
    %10 = vector.shape_cast %9 : vector<1x8x8x8xf32> to vector<8x8x8xf32>
    %11 = vector.shape_cast %10 : vector<8x8x8xf32> to vector<8x8x1x8xf32>
    %12 = vector.broadcast %11 : vector<8x8x1x8xf32> to vector<8x8x2x8xf32>
    %13 = vector.shape_cast %12 : vector<8x8x2x8xf32> to vector<8x16x8xf32>
    %14 = vector.shape_cast %13 : vector<8x16x8xf32> to vector<8x1x16x8xf32>
    %15 = vector.broadcast %14 : vector<8x1x16x8xf32> to vector<8x2x16x8xf32>
    %16 = vector.shape_cast %15 : vector<8x2x16x8xf32> to vector<16x16x8xf32>
    %17 = arith.addf %8, %16 : vector<16x16x8xf32>
    %c0_11 = arith.constant 0 : index
    %c0_12 = arith.constant 0 : index
    %c0_13 = arith.constant 0 : index
    %c0_14 = arith.constant 0 : index
    %18 = vector.load %arg6[%c0_11, %c0_12, %c0_13, %c0_14] : memref<1x16x16x8xf32, #tpu.memory_space<vmem>>, vector<1x16x16x8xf32>
    %19 = vector.shape_cast %18 : vector<1x16x16x8xf32> to vector<16x16x8xf32>
    %20 = vector.shape_cast %17 : vector<16x16x8xf32> to vector<1x16x16x8xf32>
    tpu.vector_store %arg6[%c0_11, %c0_12, %c0_13, %c0_14], %20 {strides = array<i32>} : memref<1x16x16x8xf32, #tpu.memory_space<vmem>>, vector<1x16x16x8xf32>,
    return
  }
  func.func @transform_0(%arg0: i32, %arg1: i32) -> (i32, i32, i32, i32) {
    %c0_i32 = arith.constant 0 : i32
    %c0_i32_0 = arith.constant 0 : i32
    %c0_i32_1 = arith.constant 0 : i32
    return %arg0, %arg1, %c0_i32, %c0_i32_0 : i32, i32, i32, i32
  }
  func.func @transform_1(%arg0: i32, %arg1: i32) -> (i32, i32, i32, i32) {
    %c0_i32 = arith.constant 0 : i32
    %c0_i32_0 = arith.constant 0 : i32
    %c0_i32_1 = arith.constant 0 : i32
    return %arg0, %arg1, %c0_i32, %c0_i32_0 : i32, i32, i32, i32
  }
  func.func @transform_2(%arg0: i32, %arg1: i32) -> (i32, i32) {
    %c0_i32 = arith.constant 0 : i32
    %c0_i32_0 = arith.constant 0 : i32
    %c0_i32_1 = arith.constant 0 : i32
    return %c0_i32, %c0_i32_0 : i32, i32
  }
  func.func @transform_3(%arg0: i32, %arg1: i32) -> (i32, i32) {
    %c0_i32 = arith.constant 0 : i32
    %c0_i32_0 = arith.constant 0 : i32
    %c0_i32_1 = arith.constant 0 : i32
    return %c0_i32, %c0_i32_0 : i32, i32
  }
  func.func @transform_4(%arg0: i32, %arg1: i32) -> (i32, i32, i32, i32) {
    %c0_i32 = arith.constant 0 : i32
    %c0_i32_0 = arith.constant 0 : i32
    %c0_i32_1 = arith.constant 0 : i32
    return %arg0, %arg1, %c0_i32, %c0_i32_0 : i32, i32, i32, i32
  }
}

</mosaic_0001>

<llo_original>
// kernel: fpn_block_forward.1
$region0: #{fpn_block_forward.1}
  #allocation0 [shape = 'u32[]', space=smem, size = 0x4, offset = 0x4, fixed_abs, tag = 'smem constant byte address 0x4 - core index']
  #allocation1 [shape = 'u32[144,128]{1,0:T(1,128)}', space=vmem, size = 0x12000, scoped, tag = 'internal scratch']
  %s0 = inlined_call_operand.vmem [shape: f32[2,8,8,8], index: 0, kind: input, shape index: {}]
  %s1 = inlined_call_operand.vmem [shape: f32[2,16,16,4], index: 1, kind: input, shape index: {}]
  %s2 = inlined_call_operand.vmem [shape: f32[4,8], index: 2, kind: input, shape index: {}]
  %s3 = inlined_call_operand.vmem [shape: f32[1,8], index: 3, kind: input, shape index: {}]
  %s4 = inlined_call_operand.vmem [shape: f32[2,16,16,8], index: 4, kind: output, shape index: {}]
  %s5 = sld [smem:[#allocation0]]
  $region49: #{fpn_block_forward.1} parent=0
    _
  %s7 = ssub.s32 1, %s5
  %s8 = scalar_select 0, %s7, %s5
  loop: start=0, step=1, limit=4
  $region2: #{fpn_block_forward.1} parent=0 // loop_pre_header
    _
  $region3: #{fpn_block_forward.1} parent=0 // loop_header
    %s10 = sphi 0, %s14
    %p11 = scmp.ge.s32.totalorder %s10, 4
    %s17 = sphi 0, %s29
    %s18 = sphi 0, %s25
    %s19 = sphi 0, %s17
    %s20 = sphi 0, %s18
    %s21 = sphi 0, %s19
    %s22 = sphi 0, %s20
    %s34 = sphi 0, %s36
    %s37 = sphi 0, %s34
    %s38 = sphi 0, %s37
    %s54 = sphi 0, %s38
    %s62 = sphi 0, %s64
    %s65 = sphi 0, %s62
    %s66 = sphi 0, %s65
    %s82 = sphi 0, %s66
    %s86 = sphi 0, %s86
    %s88 = sphi 0, %s86
    %s89 = sphi 0, %s88
    %s103 = sphi 0, %s89
    %s107 = sphi 0, %s107
    %s109 = sphi 0, %s107
    %s110 = sphi 0, %s109
    %s124 = sphi 0, %s110
    %s132 = sphi 0, %s134
    %s135 = sphi 0, %s132
    %s136 = sphi 0, %s135
    %s152 = sphi 0, %s136
  $region4: #{fpn_block_forward.1} parent=0 // loop_header_branch
    %13 = sbr.rel (%p11) target = $region8
  $region5: #{fpn_block_forward.1} parent=0 // loop_body
    %s15 = ssub.s32 %s10, 1
    %s16 = ssub.s32 %s10, 2
    %s23 = sadd.s32 1, %s18
    %p24 = scmp.ge.s32.totalorder %s23, 1
    %s25 = scalar_select %p24, 0, %s23
    %s26 = sadd.s32 1, %s17
    %s27 = scalar_select %p24, %s26, %s17
    %p28 = scmp.ge.s32.totalorder %s27, 2
    %s29 = scalar_select %p28, 0, %s27
    %s30 = ssub.s32 %s17, %s29
    %s31 = ssub.s32 %s18, %s25
    %s32 = sor.u32 %s30, %s31
    %p33 = scmp.eq.s32.totalorder %s32, 0
    %s35 = sadd.s32 %s34, 1
    %s36 = scalar_select %p33, %s34, %s35
    %p39 = pneg %p33
    %p40 = scmp.eq.s32.totalorder %s10, 1
    %p41 = por %p39, %p40
    %p42 = scmp.ne.s32.totalorder %s34, %s37
    %p43 = scmp.eq.s32.totalorder %s10, 0
    %p44 = por %p42, %p43
    %p45 = scmp.ne.s32.totalorder %s34, %s37
    %p46 = scmp.eq.s32.totalorder %s15, 1
    %p47 = por %p45, %p46
    %p48 = scmp.ne.s32.totalorder %s37, %s38
    %p49 = scmp.eq.s32.totalorder %s15, 0
    %p50 = por %p48, %p49
    %p51 = scmp.ne.s32.totalorder %s37, %s38
    %p52 = scmp.eq.s32.totalorder %s16, 1
    %p53 = por %p51, %p52
    %p55 = scmp.ne.s32.totalorder %s38, %s54
    %p56 = scmp.eq.s32.totalorder %s16, 0
    %p57 = por %p55, %p56
    %s58 = ssub.s32 %s17, %s29
    %s59 = ssub.s32 %s18, %s25
    %s60 = sor.u32 %s58, %s59
    %p61 = scmp.eq.s32.totalorder %s60, 0
    %s63 = sadd.s32 %s62, 1
    %s64 = scalar_select %p61, %s62, %s63
    %p67 = pneg %p61
    %p68 = scmp.eq.s32.totalorder %s10, 1
    %p69 = por %p67, %p68
    %p70 = scmp.ne.s32.totalorder %s62, %s65
    %p71 = scmp.eq.s32.totalorder %s10, 0
    %p72 = por %p70, %p71
    %p73 = scmp.ne.s32.totalorder %s62, %s65
    %p74 = scmp.eq.s32.totalorder %s15, 1
    %p75 = por %p73, %p74
    %p76 = scmp.ne.s32.totalorder %s65, %s66
    %p77 = scmp.eq.s32.totalorder %s15, 0
    %p78 = por %p76, %p77
    %p79 = scmp.ne.s32.totalorder %s65, %s66
    %p80 = scmp.eq.s32.totalorder %s16, 1
    %p81 = por %p79, %p80
    %p83 = scmp.ne.s32.totalorder %s66, %s82
    %p84 = scmp.eq.s32.totalorder %s16, 0
    %p85 = por %p83, %p84
    %s87 = sadd.s32 %s86, 1
    %p90 = scmp.eq.s32.totalorder %s10, 1
    %p91 = scmp.ne.s32.totalorder %s86, %s88
    %p92 = scmp.eq.s32.totalorder %s10, 0
    %p93 = por %p91, %p92
    %p94 = scmp.ne.s32.totalorder %s86, %s88
    %p95 = scmp.eq.s32.totalorder %s15, 1
    %p96 = por %p94, %p95
    %p97 = scmp.ne.s32.totalorder %s88, %s89
    %p98 = scmp.eq.s32.totalorder %s15, 0
    %p99 = por %p97, %p98
    %p100 = scmp.ne.s32.totalorder %s88, %s89
    %p101 = scmp.eq.s32.totalorder %s16, 1
    %p102 = por %p100, %p101
    %p104 = scmp.ne.s32.totalorder %s89, %s103
    %p105 = scmp.eq.s32.totalorder %s16, 0
    %p106 = por %p104, %p105
    %s108 = sadd.s32 %s107, 1
    %p111 = scmp.eq.s32.totalorder %s10, 1
    %p112 = scmp.ne.s32.totalorder %s107, %s109
    %p113 = scmp.eq.s32.totalorder %s10, 0
    %p114 = por %p112, %p113
    %p115 = scmp.ne.s32.totalorder %s107, %s109
    %p116 = scmp.eq.s32.totalorder %s15, 1
    %p117 = por %p115, %p116
    %p118 = scmp.ne.s32.totalorder %s109, %s110
    %p119 = scmp.eq.s32.totalorder %s15, 0
    %p120 = por %p118, %p119
    %p121 = scmp.ne.s32.totalorder %s109, %s110
    %p122 = scmp.eq.s32.totalorder %s16, 1
    %p123 = por %p121, %p122
    %p125 = scmp.ne.s32.totalorder %s110, %s124
    %p126 = scmp.eq.s32.totalorder %s16, 0
    %p127 = por %p125, %p126
    %s128 = ssub.s32 %s17, %s29
    %s129 = ssub.s32 %s18, %s25
    %s130 = sor.u32 %s128, %s129
    %p131 = scmp.eq.s32.totalorder %s130, 0
    %s133 = sadd.s32 %s132, 1
    %s134 = scalar_select %p131, %s132, %s133
    %p137 = pneg %p131
    %p138 = scmp.eq.s32.totalorder %s10, 1
    %p139 = por %p137, %p138
    %p140 = scmp.ne.s32.totalorder %s132, %s135
    %p141 = scmp.eq.s32.totalorder %s10, 0
    %p142 = por %p140, %p141
    %p143 = scmp.ne.s32.totalorder %s132, %s135
    %p144 = scmp.eq.s32.totalorder %s15, 1
    %p145 = por %p143, %p144
    %p146 = scmp.ne.s32.totalorder %s135, %s136
    %p147 = scmp.eq.s32.totalorder %s15, 0
    %p148 = por %p146, %p147
    %p149 = scmp.ne.s32.totalorder %s135, %s136
    %p150 = scmp.eq.s32.totalorder %s16, 1
    %p151 = por %p149, %p150
    %p153 = scmp.ne.s32.totalorder %s136, %s152
    %p154 = scmp.eq.s32.totalorder %s16, 0
    %p155 = por %p153, %p154
    %p156 = scmp.le.s32.totalorder 1, %s10
    %p157 = scmp.lt.s32.totalorder %s10, 3
    %p158 = pnand %p156, %p157
    %p159 = pneg %p158
    // Predicated region
    $region9: #{fpn_block_forward.1} parent=5 // pred_check
      _
    $region10: #{fpn_block_forward.1} parent=5 // pred_check_branch
      %161 = sbr.rel (%p158) target = $region12
    $region11: #{fpn_block_forward.1} parent=5 // pred_region
      %s162 = ssub.s32 %s10, 1
      // Predicated region
      $region13: #{fpn_block_forward.1} parent=11 // pred_check
        %p163 = pneg %p99
      $region14: #{fpn_block_forward.1} parent=11 // pred_check_branch
        %165 = sbr.rel (%p163) target = $region16
      $region15: #{fpn_block_forward.1} parent=11 // pred_region
        _
      $region16: #{fpn_block_forward.1} parent=11 // pred_fallthru
        _
      // Predicated region
      $region17: #{fpn_block_forward.1} parent=11 // pred_check
        %p166 = pneg %p120
      $region18: #{fpn_block_forward.1} parent=11 // pred_check_branch
        %168 = sbr.rel (%p166) target = $region20
      $region19: #{fpn_block_forward.1} parent=11 // pred_region
        _
      $region20: #{fpn_block_forward.1} parent=11 // pred_fallthru
        _
    $region12: #{fpn_block_forward.1} parent=5 // pred_fallthru
      _
    %p169 = scmp.lt.s32.totalorder %s10, 2
    // Predicated region
    $region21: #{fpn_block_forward.1} parent=5 // pred_check
      %p170 = pneg %p169
    $region22: #{fpn_block_forward.1} parent=5 // pred_check_branch
      %172 = sbr.rel (%p170) target = $region24
    $region23: #{fpn_block_forward.1} parent=5 // pred_region
      // Predicated region
      $region25: #{fpn_block_forward.1} parent=23 // pred_check
        %p173 = pneg %p44
      $region26: #{fpn_block_forward.1} parent=23 // pred_check_branch
        %175 = sbr.rel (%p173) target = $region28
      $region27: #{fpn_block_forward.1} parent=23 // pred_region
        %s176 = smul.u32 8, %s18
        %p177 = scmp.lt.s32.totalorder %s17, 1
        %s178 = scalar_select %p177, %s17, 1
        %p179 = scmp.lt.s32.totalorder %s176, 7
        %s180 = scalar_select %p179, %s176, 7
        %s181 = smul.addr %s178, 8
        %s182 = sadd.s32 %s180, %s181
        %s183 = smul.addr %s182, 8
        %s184 = scalar_lea.vmem %s0, %s183
        %s185 = smul.u32 8, %s18
      $region28: #{fpn_block_forward.1} parent=23 // pred_fallthru
        _
      // Predicated region
      $region29: #{fpn_block_forward.1} parent=23 // pred_check
        %p186 = pneg %p72
      $region30: #{fpn_block_forward.1} parent=23 // pred_check_branch
        %188 = sbr.rel (%p186) target = $region32
      $region31: #{fpn_block_forward.1} parent=23 // pred_region
        %s189 = smul.u32 16, %s18
        %p190 = scmp.lt.s32.totalorder %s17, 1
        %s191 = scalar_select %p190, %s17, 1
        %p192 = scmp.lt.s32.totalorder %s189, 15
        %s193 = scalar_select %p192, %s189, 15
        %s194 = smul.addr %s193, 2
        %s195 = smul.addr %s191, 32
        %s196 = sadd.s32 %s194, %s195
        %s197 = smul.addr %s196, 8
        %s198 = scalar_lea.vmem %s1, %s197
        %s199 = smul.u32 16, %s18
      $region32: #{fpn_block_forward.1} parent=23 // pred_fallthru
        _
    $region24: #{fpn_block_forward.1} parent=5 // pred_fallthru
      _
    %p200 = scmp.le.s32.totalorder 1, %s10
    %p201 = scmp.lt.s32.totalorder %s10, 3
    %p202 = pnand %p200, %p201
    %p203 = pneg %p202
    // Predicated region
    $region33: #{fpn_block_forward.1} parent=5 // pred_check
      _
    $region34: #{fpn_block_forward.1} parent=5 // pred_check_branch
      %205 = sbr.rel (%p202) target = $region36
    $region35: #{fpn_block_forward.1} parent=5 // pred_region
      %s206 = ssub.s32 %s10, 1
      %s207 = smul.u32 8, %s20
      %p208 = scmp.lt.s32.totalorder %s19, 1
      %s209 = scalar_select %p208, %s19, 1
      %p210 = scmp.lt.s32.totalorder %s207, 7
      %s211 = scalar_select %p210, %s207, 7
      %s212 = smul.addr %s209, 8
      %s213 = sadd.s32 %s211, %s212
      %s214 = smul.addr %s213, 8
      %s215 = scalar_lea.vmem %s0, %s214
      %p216 = pneg %p50
      %p217 = pneg %p47
      %s218 = smul.u32 16, %s20
      %p219 = scmp.lt.s32.totalorder %s19, 1
      %s220 = scalar_select %p219, %s19, 1
      %p221 = scmp.lt.s32.totalorder %s218, 15
      %s222 = scalar_select %p221, %s218, 15
      %s223 = smul.addr %s222, 2
      %s224 = smul.addr %s220, 32
      %s225 = sadd.s32 %s223, %s224
      %s226 = smul.addr %s225, 8
      %s227 = scalar_lea.vmem %s1, %s226
      %p228 = pneg %p78
      %p229 = pneg %p75
      %p230 = pneg %p99
      %p231 = pneg %p96
      %p232 = pneg %p120
      %p233 = pneg %p117
      %p234 = pneg %p148
      %p235 = pneg %p145
      %s236 = smul.u32 16, %s20
      %p237 = scmp.lt.s32.totalorder %s19, 1
      %s238 = scalar_select %p237, %s19, 1
      %p239 = scmp.lt.s32.totalorder %s236, 15
      %s240 = scalar_select %p239, %s236, 15
      %s241 = smul.addr %s240, 2
      %s242 = smul.addr %s238, 32
      %s243 = sadd.s32 %s241, %s242
      %s244 = smul.addr %s243, 8
      %s245 = scalar_lea.vmem %s4, %s244
      %s246 = smul.u32 8, %s20
      %p247 = scmp.lt.s32.totalorder %s19, 1
      %s248 = scalar_select %p247, %s19, 1
      %p249 = scmp.lt.s32.totalorder %s246, 7
      %s250 = scalar_select %p249, %s246, 7
      %s251 = smul.addr %s248, 8
      %s252 = sadd.s32 %s250, %s251
      %s253 = smul.addr %s252, 8
      %s254 = scalar_lea.vmem %s0, %s253
      %s255 = smul.u32 8, %s20
      %s256 = smul.u32 16, %s20
      %p257 = scmp.lt.s32.totalorder %s19, 1
      %s258 = scalar_select %p257, %s19, 1
      %p259 = scmp.lt.s32.totalorder %s256, 15
      %s260 = scalar_select %p259, %s256, 15
      %s261 = smul.addr %s260, 2
      %s262 = smul.addr %s258, 32
      %s263 = sadd.s32 %s261, %s262
      %s264 = smul.addr %s263, 8
      %s265 = scalar_lea.vmem %s1, %s264
      %s266 = smul.u32 16, %s20
      %s267 = smul.u32 16, %s20
      %p268 = scmp.lt.s32.totalorder %s19, 1
      %s269 = scalar_select %p268, %s19, 1
      %p270 = scmp.lt.s32.totalorder %s267, 15
      %s271 = scalar_select %p270, %s267, 15
      %s272 = smul.addr %s271, 2
      %s273 = smul.addr %s269, 32
      %s274 = sadd.s32 %s272, %s273
      %s275 = smul.addr %s274, 8
      %s276 = scalar_lea.vmem %s4, %s275
      %s277 = smul.u32 16, %s20
      %v278 = vld [vmem:[%s265] sm:$0xff]
      %v279 = vld [vmem:[%s265 + $0x8] sm:$0xff]
      %v280 = vld [vmem:[%s265 + $0x10] sm:$0xff]
      %v281 = vld [vmem:[%s265 + $0x18] sm:$0xff]
      %v282 = vld [vmem:[%s265 + $0x20] sm:$0xff]
      %v283 = vld [vmem:[%s265 + $0x28] sm:$0xff]
      %v284 = vld [vmem:[%s265 + $0x30] sm:$0xff]
      %v285 = vld [vmem:[%s265 + $0x38] sm:$0xff]
      %v286 = vld [vmem:[%s265 + $0x40] sm:$0xff]
      %v287 = vld [vmem:[%s265 + $0x48] sm:$0xff]
      %v288 = vld [vmem:[%s265 + $0x50] sm:$0xff]
      %v289 = vld [vmem:[%s265 + $0x58] sm:$0xff]
      %v290 = vld [vmem:[%s265 + $0x60] sm:$0xff]
      %v291 = vld [vmem:[%s265 + $0x68] sm:$0xff]
      %v292 = vld [vmem:[%s265 + $0x70] sm:$0xff]
      %v293 = vld [vmem:[%s265 + $0x78] sm:$0xff]
      %v294 = vld [vmem:[%s265 + $0x80] sm:$0xff]
      %v295 = vld [vmem:[%s265 + $0x88] sm:$0xff]
      %v296 = vld [vmem:[%s265 + $0x90] sm:$0xff]
      %v297 = vld [vmem:[%s265 + $0x98] sm:$0xff]
      %v298 = vld [vmem:[%s265 + $0xa0] sm:$0xff]
      %v299 = vld [vmem:[%s265 + $0xa8] sm:$0xff]
      %v300 = vld [vmem:[%s265 + $0xb0] sm:$0xff]
      %v301 = vld [vmem:[%s265 + $0xb8] sm:$0xff]
      %v302 = vld [vmem:[%s265 + $0xc0] sm:$0xff]
      %v303 = vld [vmem:[%s265 + $0xc8] sm:$0xff]
      %v304 = vld [vmem:[%s265 + $0xd0] sm:$0xff]
      %v305 = vld [vmem:[%s265 + $0xd8] sm:$0xff]
      %v306 = vld [vmem:[%s265 + $0xe0] sm:$0xff]
      %v307 = vld [vmem:[%s265 + $0xe8] sm:$0xff]
      %v308 = vld [vmem:[%s265 + $0xf0] sm:$0xff]
      %v309 = vld [vmem:[%s265 + $0xf8] sm:$0xff]
      %v310 = vld [vmem:[%s2] sm:$0xf]
      %v311 = vld [vmem:[%s3] sm:$0x1]
      %v313 = vlaneseq
      %v314 = vshrl.u32 %v313, 7
      %v315 = vsub.s32 0, %v314
      %v316 = vrot.slane %v311, %v315
      %vm318 = vcmask 31744
      %v320 = vsel %vm318, %v278, 0
      %v323 = vsel %vm318, %v279, 0
      %v326 = vsel %vm318, %v280, 0
      %v329 = vsel %vm318, %v281, 0
      %v332 = vsel %vm318, %v282, 0
      %v335 = vsel %vm318, %v283, 0
      %v338 = vsel %vm318, %v284, 0
      %v341 = vsel %vm318, %v285, 0
      %v344 = vsel %vm318, %v286, 0
      %v347 = vsel %vm318, %v287, 0
      %v350 = vsel %vm318, %v288, 0
      %v353 = vsel %vm318, %v289, 0
      %v356 = vsel %vm318, %v290, 0
      %v359 = vsel %vm318, %v291, 0
      %v362 = vsel %vm318, %v292, 0
      %v365 = vsel %vm318, %v293, 0
      %v368 = vsel %vm318, %v294, 0
      %v371 = vsel %vm318, %v295, 0
      %v374 = vsel %vm318, %v296, 0
      %v377 = vsel %vm318, %v297, 0
      %v380 = vsel %vm318, %v298, 0
      %v383 = vsel %vm318, %v299, 0
      %v386 = vsel %vm318, %v300, 0
      %v389 = vsel %vm318, %v301, 0
      %v392 = vsel %vm318, %v302, 0
      %v395 = vsel %vm318, %v303, 0
      %v398 = vsel %vm318, %v304, 0
      %v401 = vsel %vm318, %v305, 0
      %v404 = vsel %vm318, %v306, 0
      %v407 = vsel %vm318, %v307, 0
      %v410 = vsel %vm318, %v308, 0
      %v413 = vsel %vm318, %v309, 0
      %vm415 = vcmask 1043456
      %v417 = vsel %vm415, %v310, 0
      %419 = vmatprep.subr.mxu0 0.0
      %420 = vmatpush1.msra.mxu0 0.0
      %421 = vmatprep.subr.mxu0 0.0
      %422 = vmatpush1.msra.mxu0 0.0
      %423 = vmatprep.subr.mxu0 0.0
      %424 = vmatpush1.msra.mxu0 0.0
      %425 = vmatprep.subr.mxu0 0.0
      %426 = vmatpush1.msra.mxu0 0.0
      %427 = vmatprep.subr.mxu0 0.0
      %428 = vmatpush1.msra.mxu0 0.0
      %429 = vmatprep.subr.mxu0 0.0
      %430 = vmatpush1.msra.mxu0 0.0
      %431 = vmatprep.subr.mxu0 0.0
      %432 = vmatpush1.msra.mxu0 0.0
      %433 = vmatprep.subr.mxu0 0.0
      %434 = vmatpush1.msra.mxu0 0.0
      %435 = vmatprep.subr.mxu0 0.0
      %436 = vmatpush1.msra.mxu0 0.0
      %437 = vmatprep.subr.mxu0 0.0
      %438 = vmatpush1.msra.mxu0 0.0
      %439 = vmatprep.subr.mxu0 0.0
      %440 = vmatpush1.msra.mxu0 0.0
      %441 = vmatprep.subr.mxu0 0.0
      %442 = vmatpush1.msra.mxu0 0.0
      %443 = vmatprep.subr.mxu0 0.0
      %444 = vmatpush1.msra.mxu0 0.0
      %445 = vmatprep.subr.mxu0 0.0
      %446 = vmatpush1.msra.mxu0 0.0
      %447 = vmatprep.subr.mxu0 0.0
      %448 = vmatpush1.msra.mxu0 0.0
      %449 = vmatprep.subr.mxu0 0.0
      %450 = vmatpush1.msra.mxu0 %v417
      %451 = vmatprep.subr.mxu0 0.0
      %452 = vmatpush2.msra.mxu0 0.0
      %453 = vmatprep.subr.mxu0 0.0
      %454 = vmatpush2.msra.mxu0 0.0
      %455 = vmatprep.subr.mxu0 0.0
      %456 = vmatpush2.msra.mxu0 0.0
      %457 = vmatprep.subr.mxu0 0.0
      %458 = vmatpush2.msra.mxu0 0.0
      %459 = vmatprep.subr.mxu0 0.0
      %460 = vmatpush2.msra.mxu0 0.0
      %461 = vmatprep.subr.mxu0 0.0
      %462 = vmatpush2.msra.mxu0 0.0
      %463 = vmatprep.subr.mxu0 0.0
      %464 = vmatpush2.msra.mxu0 0.0
      %465 = vmatprep.subr.mxu0 0.0
      %466 = vmatpush2.msra.mxu0 0.0
      %467 = vmatprep.subr.mxu0 0.0
      %468 = vmatpush2.msra.mxu0 0.0
      %469 = vmatprep.subr.mxu0 0.0
      %470 = vmatpush2.msra.mxu0 0.0
      %471 = vmatprep.subr.mxu0 0.0
      %472 = vmatpush2.msra.mxu0 0.0
      %473 = vmatprep.subr.mxu0 0.0
      %474 = vmatpush2.msra.mxu0 0.0
      %475 = vmatprep.subr.mxu0 0.0
      %476 = vmatpush2.msra.mxu0 0.0
      %477 = vmatprep.subr.mxu0 0.0
      %478 = vmatpush2.msra.mxu0 0.0
      %479 = vmatprep.subr.mxu0 0.0
      %480 = vmatpush2.msra.mxu0 0.0
      %481 = vmatprep.subr.mxu0 0.0
      %482 = vmatpush2.msra.mxu0 0.0
      %483 = vmatprep.mubr.f32.mxu0 0.0
      %484 = vmatmul.mubr.f32.gmra.mxu0 %v320
      %v485 = vpop.f32.mrf.mxu0
      %v486 = vadd.f32 %v316, %v485
      %v487 = vpop.f32.mrf.mxu0
      %488 = vmatprep.mubr.f32.mxu0 0.0
      %489 = vmatmul.mubr.f32.gmra.mxu0 %v323
      %v490 = vpop.f32.mrf.mxu0
      %v491 = vadd.f32 %v316, %v490
      %v492 = vpop.f32.mrf.mxu0
      %493 = vmatprep.mubr.f32.mxu0 0.0
      %494 = vmatmul.mubr.f32.gmra.mxu0 %v326
      %v495 = vpop.f32.mrf.mxu0
      %v496 = vadd.f32 %v316, %v495
      %v497 = vpop.f32.mrf.mxu0
      %498 = vmatprep.mubr.f32.mxu0 0.0
      %499 = vmatmul.mubr.f32.gmra.mxu0 %v329
      %v500 = vpop.f32.mrf.mxu0
      %v501 = vadd.f32 %v316, %v500
      %v502 = vpop.f32.mrf.mxu0
      %503 = vmatprep.mubr.f32.mxu0 0.0
      %504 = vmatmul.mubr.f32.gmra.mxu0 %v332
      %v505 = vpop.f32.mrf.mxu0
      %v506 = vadd.f32 %v316, %v505
      %v507 = vpop.f32.mrf.mxu0
      %508 = vmatprep.mubr.f32.mxu0 0.0
      %509 = vmatmul.mubr.f32.gmra.mxu0 %v335
      %v510 = vpop.f32.mrf.mxu0
      %v511 = vadd.f32 %v316, %v510
      %v512 = vpop.f32.mrf.mxu0
      %513 = vmatprep.mubr.f32.mxu0 0.0
      %514 = vmatmul.mubr.f32.gmra.mxu0 %v338
      %v515 = vpop.f32.mrf.mxu0
      %v516 = vadd.f32 %v316, %v515
      %v517 = vpop.f32.mrf.mxu0
      %518 = vmatprep.mubr.f32.mxu0 0.0
      %519 = vmatmul.mubr.f32.gmra.mxu0 %v341
      %v520 = vpop.f32.mrf.mxu0
      %v521 = vadd.f32 %v316, %v520
      %v522 = vpop.f32.mrf.mxu0
      %523 = vmatprep.mubr.f32.mxu0 0.0
      %524 = vmatmul.mubr.f32.gmra.mxu0 %v344
      %v525 = vpop.f32.mrf.mxu0
      %v526 = vadd.f32 %v316, %v525
      %v527 = vpop.f32.mrf.mxu0
      %528 = vmatprep.mubr.f32.mxu0 0.0
      %529 = vmatmul.mubr.f32.gmra.mxu0 %v347
      %v530 = vpop.f32.mrf.mxu0
      %v531 = vadd.f32 %v316, %v530
      %v532 = vpop.f32.mrf.mxu0
      %533 = vmatprep.mubr.f32.mxu0 0.0
      %534 = vmatmul.mubr.f32.gmra.mxu0 %v350
      %v535 = vpop.f32.mrf.mxu0
      %v536 = vadd.f32 %v316, %v535
      %v537 = vpop.f32.mrf.mxu0
      %538 = vmatprep.mubr.f32.mxu0 0.0
      %539 = vmatmul.mubr.f32.gmra.mxu0 %v353
      %v540 = vpop.f32.mrf.mxu0
      %v541 = vadd.f32 %v316, %v540
      %v542 = vpop.f32.mrf.mxu0
      %543 = vmatprep.mubr.f32.mxu0 0.0
      %544 = vmatmul.mubr.f32.gmra.mxu0 %v356
      %v545 = vpop.f32.mrf.mxu0
      %v546 = vadd.f32 %v316, %v545
      %v547 = vpop.f32.mrf.mxu0
      %548 = vmatprep.mubr.f32.mxu0 0.0
      %549 = vmatmul.mubr.f32.gmra.mxu0 %v359
      %v550 = vpop.f32.mrf.mxu0
      %v551 = vadd.f32 %v316, %v550
      %v552 = vpop.f32.mrf.mxu0
      %553 = vmatprep.mubr.f32.mxu0 0.0
      %554 = vmatmul.mubr.f32.gmra.mxu0 %v362
      %v555 = vpop.f32.mrf.mxu0
      %v556 = vadd.f32 %v316, %v555
      %v557 = vpop.f32.mrf.mxu0
      %558 = vmatprep.mubr.f32.mxu0 0.0
      %559 = vmatmul.mubr.f32.gmra.mxu0 %v365
      %v560 = vpop.f32.mrf.mxu0
      %v561 = vadd.f32 %v316, %v560
      %v562 = vpop.f32.mrf.mxu0
      %563 = vmatprep.mubr.f32.mxu0 0.0
      %564 = vmatmul.mubr.f32.gmra.mxu0 %v368
      %v565 = vpop.f32.mrf.mxu0
      %v566 = vadd.f32 %v316, %v565
      %v567 = vpop.f32.mrf.mxu0
      %568 = vmatprep.mubr.f32.mxu0 0.0
      %569 = vmatmul.mubr.f32.gmra.mxu0 %v371
      %v570 = vpop.f32.mrf.mxu0
      %v571 = vadd.f32 %v316, %v570
      %v572 = vpop.f32.mrf.mxu0
      %573 = vmatprep.mubr.f32.mxu0 0.0
      %574 = vmatmul.mubr.f32.gmra.mxu0 %v374
      %v575 = vpop.f32.mrf.mxu0
      %v576 = vadd.f32 %v316, %v575
      %v577 = vpop.f32.mrf.mxu0
      %578 = vmatprep.mubr.f32.mxu0 0.0
      %579 = vmatmul.mubr.f32.gmra.mxu0 %v377
      %v580 = vpop.f32.mrf.mxu0
      %v581 = vadd.f32 %v316, %v580
      %v582 = vpop.f32.mrf.mxu0
      %583 = vmatprep.mubr.f32.mxu0 0.0
      %584 = vmatmul.mubr.f32.gmra.mxu0 %v380
      %v585 = vpop.f32.mrf.mxu0
      %v586 = vadd.f32 %v316, %v585
      %v587 = vpop.f32.mrf.mxu0
      %588 = vmatprep.mubr.f32.mxu0 0.0
      %589 = vmatmul.mubr.f32.gmra.mxu0 %v383
      %v590 = vpop.f32.mrf.mxu0
      %v591 = vadd.f32 %v316, %v590
      %v592 = vpop.f32.mrf.mxu0
      %593 = vmatprep.mubr.f32.mxu0 0.0
      %594 = vmatmul.mubr.f32.gmra.mxu0 %v386
      %v595 = vpop.f32.mrf.mxu0
      %v596 = vadd.f32 %v316, %v595
      %v597 = vpop.f32.mrf.mxu0
      %598 = vmatprep.mubr.f32.mxu0 0.0
      %599 = vmatmul.mubr.f32.gmra.mxu0 %v389
      %v600 = vpop.f32.mrf.mxu0
      %v601 = vadd.f32 %v316, %v600
      %v602 = vpop.f32.mrf.mxu0
      %603 = vmatprep.mubr.f32.mxu0 0.0
      %604 = vmatmul.mubr.f32.gmra.mxu0 %v392
      %v605 = vpop.f32.mrf.mxu0
      %v606 = vadd.f32 %v316, %v605
      %v607 = vpop.f32.mrf.mxu0
      %608 = vmatprep.mubr.f32.mxu0 0.0
      %609 = vmatmul.mubr.f32.gmra.mxu0 %v395
      %v610 = vpop.f32.mrf.mxu0
      %v611 = vadd.f32 %v316, %v610
      %v612 = vpop.f32.mrf.mxu0
      %613 = vmatprep.mubr.f32.mxu0 0.0
      %614 = vmatmul.mubr.f32.gmra.mxu0 %v398
      %v615 = vpop.f32.mrf.mxu0
      %v616 = vadd.f32 %v316, %v615
      %v617 = vpop.f32.mrf.mxu0
      %618 = vmatprep.mubr.f32.mxu0 0.0
      %619 = vmatmul.mubr.f32.gmra.mxu0 %v401
      %v620 = vpop.f32.mrf.mxu0
      %v621 = vadd.f32 %v316, %v620
      %v622 = vpop.f32.mrf.mxu0
      %623 = vmatprep.mubr.f32.mxu0 0.0
      %624 = vmatmul.mubr.f32.gmra.mxu0 %v404
      %v625 = vpop.f32.mrf.mxu0
      %v626 = vadd.f32 %v316, %v625
      %v627 = vpop.f32.mrf.mxu0
      %628 = vmatprep.mubr.f32.mxu0 0.0
      %629 = vmatmul.mubr.f32.gmra.mxu0 %v407
      %v630 = vpop.f32.mrf.mxu0
      %v631 = vadd.f32 %v316, %v630
      %v632 = vpop.f32.mrf.mxu0
      %633 = vmatprep.mubr.f32.mxu0 0.0
      %634 = vmatmul.mubr.f32.gmra.mxu0 %v410
      %v635 = vpop.f32.mrf.mxu0
      %v636 = vadd.f32 %v316, %v635
      %v637 = vpop.f32.mrf.mxu0
      %638 = vmatprep.mubr.f32.mxu0 0.0
      %639 = vmatmul.mubr.f32.gmra.mxu0 %v413
      %v640 = vpop.f32.mrf.mxu0
      %v641 = vadd.f32 %v316, %v640
      %v642 = vpop.f32.mrf.mxu0
      %643 = vdwg.mxu0
      %v644 = vld [vmem:[%s254] sm:$0xff]
      %v645 = vld [vmem:[%s254 + $0x8] sm:$0xff]
      %v646 = vld [vmem:[%s254 + $0x10] sm:$0xff]
      %v647 = vld [vmem:[%s254 + $0x18] sm:$0xff]
      %v648 = vld [vmem:[%s254 + $0x20] sm:$0xff]
      %v649 = vld [vmem:[%s254 + $0x28] sm:$0xff]
      %v650 = vld [vmem:[%s254 + $0x30] sm:$0xff]
      %v651 = vld [vmem:[%s254 + $0x38] sm:$0xff]
      %v660 = vcombine.high %v644, %v644
      %v662 = vunpack.c.l.s4 1966171168
      %v663 = vunpack.c.0.s8 %v662
      %v664 = vlaneseq
      %v665 = vshrl.u32 %v664, 7
      %v666 = vsub.s32 %v663, %v665
      %v667 = vrot.slane %v644, %v666
      %v669 = vunpack.c.l.s4 1966171168
      %v670 = vunpack.c.0.s8 %v669
      %v671 = vlaneseq
      %v672 = vshrl.u32 %v671, 7
      %v673 = vsub.s32 %v670, %v672
      %v674 = vrot.slane %v660, %v673
      %v675 = vcombine.high %v667, %v667
      %v676 = vcombine.high %v674, %v674
      %v678 = vunpack.c.l.s4 1966171168
      %v679 = vunpack.c.0.s8 %v678
      %v680 = vlaneseq
      %v681 = vshrl.u32 %v680, 7
      %v682 = vsub.s32 %v679, %v681
      %v683 = vrot.slane %v667, %v682
      %v685 = vunpack.c.l.s4 1966171168
      %v686 = vunpack.c.0.s8 %v685
      %v687 = vlaneseq
      %v688 = vshrl.u32 %v687, 7
      %v689 = vsub.s32 %v686, %v688
      %v690 = vrot.slane %v674, %v689
      %v692 = vunpack.c.l.s4 1966171168
      %v693 = vunpack.c.0.s8 %v692
      %v694 = vlaneseq
      %v695 = vshrl.u32 %v694, 7
      %v696 = vsub.s32 %v693, %v695
      %v697 = vrot.slane %v675, %v696
      %v699 = vunpack.c.l.s4 1966171168
      %v700 = vunpack.c.0.s8 %v699
      %v701 = vlaneseq
      %v702 = vshrl.u32 %v701, 7
      %v703 = vsub.s32 %v700, %v702
      %v704 = vrot.slane %v676, %v703
      %v705 = vcombine.high %v683, %v683
      %v706 = vcombine.high %v690, %v690
      %v707 = vcombine.high %v697, %v697
      %v708 = vcombine.high %v704, %v704
      %v709 = vcombine.high %v645, %v645
      %v711 = vunpack.c.l.s4 1966171168
      %v712 = vunpack.c.0.s8 %v711
      %v713 = vlaneseq
      %v714 = vshrl.u32 %v713, 7
      %v715 = vsub.s32 %v712, %v714
      %v716 = vrot.slane %v645, %v715
      %v718 = vunpack.c.l.s4 1966171168
      %v719 = vunpack.c.0.s8 %v718
      %v720 = vlaneseq
      %v721 = vshrl.u32 %v720, 7
      %v722 = vsub.s32 %v719, %v721
      %v723 = vrot.slane %v709, %v722
      %v724 = vcombine.high %v716, %v716
      %v725 = vcombine.high %v723, %v723
      %v727 = vunpack.c.l.s4 1966171168
      %v728 = vunpack.c.0.s8 %v727
      %v729 = vlaneseq
      %v730 = vshrl.u32 %v729, 7
      %v731 = vsub.s32 %v728, %v730
      %v732 = vrot.slane %v716, %v731
      %v734 = vunpack.c.l.s4 1966171168
      %v735 = vunpack.c.0.s8 %v734
      %v736 = vlaneseq
      %v737 = vshrl.u32 %v736, 7
      %v738 = vsub.s32 %v735, %v737
      %v739 = vrot.slane %v723, %v738
      %v741 = vunpack.c.l.s4 1966171168
      %v742 = vunpack.c.0.s8 %v741
      %v743 = vlaneseq
      %v744 = vshrl.u32 %v743, 7
      %v745 = vsub.s32 %v742, %v744
      %v746 = vrot.slane %v724, %v745
      %v748 = vunpack.c.l.s4 1966171168
      %v749 = vunpack.c.0.s8 %v748
      %v750 = vlaneseq
      %v751 = vshrl.u32 %v750, 7
      %v752 = vsub.s32 %v749, %v751
      %v753 = vrot.slane %v725, %v752
      %v754 = vcombine.high %v732, %v732
      %v755 = vcombine.high %v739, %v739
      %v756 = vcombine.high %v746, %v746
      %v757 = vcombine.high %v753, %v753
      %v758 = vcombine.high %v646, %v646
      %v760 = vunpack.c.l.s4 1966171168
      %v761 = vunpack.c.0.s8 %v760
      %v762 = vlaneseq
      %v763 = vshrl.u32 %v762, 7
      %v764 = vsub.s32 %v761, %v763
      %v765 = vrot.slane %v646, %v764
      %v767 = vunpack.c.l.s4 1966171168
      %v768 = vunpack.c.0.s8 %v767
      %v769 = vlaneseq
      %v770 = vshrl.u32 %v769, 7
      %v771 = vsub.s32 %v768, %v770
      %v772 = vrot.slane %v758, %v771
      %v773 = vcombine.high %v765, %v765
      %v774 = vcombine.high %v772, %v772
      %v776 = vunpack.c.l.s4 1966171168
      %v777 = vunpack.c.0.s8 %v776
      %v778 = vlaneseq
      %v779 = vshrl.u32 %v778, 7
      %v780 = vsub.s32 %v777, %v779
      %v781 = vrot.slane %v765, %v780
      %v783 = vunpack.c.l.s4 1966171168
      %v784 = vunpack.c.0.s8 %v783
      %v785 = vlaneseq
      %v786 = vshrl.u32 %v785, 7
      %v787 = vsub.s32 %v784, %v786
      %v788 = vrot.slane %v772, %v787
      %v790 = vunpack.c.l.s4 1966171168
      %v791 = vunpack.c.0.s8 %v790
      %v792 = vlaneseq
      %v793 = vshrl.u32 %v792, 7
      %v794 = vsub.s32 %v791, %v793
      %v795 = vrot.slane %v773, %v794
      %v797 = vunpack.c.l.s4 1966171168
      %v798 = vunpack.c.0.s8 %v797
      %v799 = vlaneseq
      %v800 = vshrl.u32 %v799, 7
      %v801 = vsub.s32 %v798, %v800
      %v802 = vrot.slane %v774, %v801
      %v803 = vcombine.high %v781, %v781
      %v804 = vcombine.high %v788, %v788
      %v805 = vcombine.high %v795, %v795
      %v806 = vcombine.high %v802, %v802
      %v807 = vcombine.high %v647, %v647
      %v809 = vunpack.c.l.s4 1966171168
      %v810 = vunpack.c.0.s8 %v809
      %v811 = vlaneseq
      %v812 = vshrl.u32 %v811, 7
      %v813 = vsub.s32 %v810, %v812
      %v814 = vrot.slane %v647, %v813
      %v816 = vunpack.c.l.s4 1966171168
      %v817 = vunpack.c.0.s8 %v816
      %v818 = vlaneseq
      %v819 = vshrl.u32 %v818, 7
      %v820 = vsub.s32 %v817, %v819
      %v821 = vrot.slane %v807, %v820
      %v822 = vcombine.high %v814, %v814
      %v823 = vcombine.high %v821, %v821
      %v825 = vunpack.c.l.s4 1966171168
      %v826 = vunpack.c.0.s8 %v825
      %v827 = vlaneseq
      %v828 = vshrl.u32 %v827, 7
      %v829 = vsub.s32 %v826, %v828
      %v830 = vrot.slane %v814, %v829
      %v832 = vunpack.c.l.s4 1966171168
      %v833 = vunpack.c.0.s8 %v832
      %v834 = vlaneseq
      %v835 = vshrl.u32 %v834, 7
      %v836 = vsub.s32 %v833, %v835
      %v837 = vrot.slane %v821, %v836
      %v839 = vunpack.c.l.s4 1966171168
      %v840 = vunpack.c.0.s8 %v839
      %v841 = vlaneseq
      %v842 = vshrl.u32 %v841, 7
      %v843 = vsub.s32 %v840, %v842
      %v844 = vrot.slane %v822, %v843
      %v846 = vunpack.c.l.s4 1966171168
      %v847 = vunpack.c.0.s8 %v846
      %v848 = vlaneseq
      %v849 = vshrl.u32 %v848, 7
      %v850 = vsub.s32 %v847, %v849
      %v851 = vrot.slane %v823, %v850
      %v852 = vcombine.high %v830, %v830
      %v853 = vcombine.high %v837, %v837
      %v854 = vcombine.high %v844, %v844
      %v855 = vcombine.high %v851, %v851
      %v856 = vcombine.high %v648, %v648
      %v858 = vunpack.c.l.s4 1966171168
      %v859 = vunpack.c.0.s8 %v858
      %v860 = vlaneseq
      %v861 = vshrl.u32 %v860, 7
      %v862 = vsub.s32 %v859, %v861
      %v863 = vrot.slane %v648, %v862
      %v865 = vunpack.c.l.s4 1966171168
      %v866 = vunpack.c.0.s8 %v865
      %v867 = vlaneseq
      %v868 = vshrl.u32 %v867, 7
      %v869 = vsub.s32 %v866, %v868
      %v870 = vrot.slane %v856, %v869
      %v871 = vcombine.high %v863, %v863
      %v872 = vcombine.high %v870, %v870
      %v874 = vunpack.c.l.s4 1966171168
      %v875 = vunpack.c.0.s8 %v874
      %v876 = vlaneseq
      %v877 = vshrl.u32 %v876, 7
      %v878 = vsub.s32 %v875, %v877
      %v879 = vrot.slane %v863, %v878
      %v881 = vunpack.c.l.s4 1966171168
      %v882 = vunpack.c.0.s8 %v881
      %v883 = vlaneseq
      %v884 = vshrl.u32 %v883, 7
      %v885 = vsub.s32 %v882, %v884
      %v886 = vrot.slane %v870, %v885
      %v888 = vunpack.c.l.s4 1966171168
      %v889 = vunpack.c.0.s8 %v888
      %v890 = vlaneseq
      %v891 = vshrl.u32 %v890, 7
      %v892 = vsub.s32 %v889, %v891
      %v893 = vrot.slane %v871, %v892
      %v895 = vunpack.c.l.s4 1966171168
      %v896 = vunpack.c.0.s8 %v895
      %v897 = vlaneseq
      %v898 = vshrl.u32 %v897, 7
      %v899 = vsub.s32 %v896, %v898
      %v900 = vrot.slane %v872, %v899
      %v901 = vcombine.high %v879, %v879
      %v902 = vcombine.high %v886, %v886
      %v903 = vcombine.high %v893, %v893
      %v904 = vcombine.high %v900, %v900
      %v905 = vcombine.high %v649, %v649
      %v907 = vunpack.c.l.s4 1966171168
      %v908 = vunpack.c.0.s8 %v907
      %v909 = vlaneseq
      %v910 = vshrl.u32 %v909, 7
      %v911 = vsub.s32 %v908, %v910
      %v912 = vrot.slane %v649, %v911
      %v914 = vunpack.c.l.s4 1966171168
      %v915 = vunpack.c.0.s8 %v914
      %v916 = vlaneseq
      %v917 = vshrl.u32 %v916, 7
      %v918 = vsub.s32 %v915, %v917
      %v919 = vrot.slane %v905, %v918
      %v920 = vcombine.high %v912, %v912
      %v921 = vcombine.high %v919, %v919
      %v923 = vunpack.c.l.s4 1966171168
      %v924 = vunpack.c.0.s8 %v923
      %v925 = vlaneseq
      %v926 = vshrl.u32 %v925, 7
      %v927 = vsub.s32 %v924, %v926
      %v928 = vrot.slane %v912, %v927
      %v930 = vunpack.c.l.s4 1966171168
      %v931 = vunpack.c.0.s8 %v930
      %v932 = vlaneseq
      %v933 = vshrl.u32 %v932, 7
      %v934 = vsub.s32 %v931, %v933
      %v935 = vrot.slane %v919, %v934
      %v937 = vunpack.c.l.s4 1966171168
      %v938 = vunpack.c.0.s8 %v937
      %v939 = vlaneseq
      %v940 = vshrl.u32 %v939, 7
      %v941 = vsub.s32 %v938, %v940
      %v942 = vrot.slane %v920, %v941
      %v944 = vunpack.c.l.s4 1966171168
      %v945 = vunpack.c.0.s8 %v944
      %v946 = vlaneseq
      %v947 = vshrl.u32 %v946, 7
      %v948 = vsub.s32 %v945, %v947
      %v949 = vrot.slane %v921, %v948
      %v950 = vcombine.high %v928, %v928
      %v951 = vcombine.high %v935, %v935
      %v952 = vcombine.high %v942, %v942
      %v953 = vcombine.high %v949, %v949
      %v954 = vcombine.high %v650, %v650
      %v956 = vunpack.c.l.s4 1966171168
      %v957 = vunpack.c.0.s8 %v956
      %v958 = vlaneseq
      %v959 = vshrl.u32 %v958, 7
      %v960 = vsub.s32 %v957, %v959
      %v961 = vrot.slane %v650, %v960
      %v963 = vunpack.c.l.s4 1966171168
      %v964 = vunpack.c.0.s8 %v963
      %v965 = vlaneseq
      %v966 = vshrl.u32 %v965, 7
      %v967 = vsub.s32 %v964, %v966
      %v968 = vrot.slane %v954, %v967
      %v969 = vcombine.high %v961, %v961
      %v970 = vcombine.high %v968, %v968
      %v972 = vunpack.c.l.s4 1966171168
      %v973 = vunpack.c.0.s8 %v972
      %v974 = vlaneseq
      %v975 = vshrl.u32 %v974, 7
      %v976 = vsub.s32 %v973, %v975
      %v977 = vrot.slane %v961, %v976
      %v979 = vunpack.c.l.s4 1966171168
      %v980 = vunpack.c.0.s8 %v979
      %v981 = vlaneseq
      %v982 = vshrl.u32 %v981, 7
      %v983 = vsub.s32 %v980, %v982
      %v984 = vrot.slane %v968, %v983
      %v986 = vunpack.c.l.s4 1966171168
      %v987 = vunpack.c.0.s8 %v986
      %v988 = vlaneseq
      %v989 = vshrl.u32 %v988, 7
      %v990 = vsub.s32 %v987, %v989
      %v991 = vrot.slane %v969, %v990
      %v993 = vunpack.c.l.s4 1966171168
      %v994 = vunpack.c.0.s8 %v993
      %v995 = vlaneseq
      %v996 = vshrl.u32 %v995, 7
      %v997 = vsub.s32 %v994, %v996
      %v998 = vrot.slane %v970, %v997
      %v999 = vcombine.high %v977, %v977
      %v1000 = vcombine.high %v984, %v984
      %v1001 = vcombine.high %v991, %v991
      %v1002 = vcombine.high %v998, %v998
      %v1003 = vcombine.high %v651, %v651
      %v1005 = vunpack.c.l.s4 1966171168
      %v1006 = vunpack.c.0.s8 %v1005
      %v1007 = vlaneseq
      %v1008 = vshrl.u32 %v1007, 7
      %v1009 = vsub.s32 %v1006, %v1008
      %v1010 = vrot.slane %v651, %v1009
      %v1012 = vunpack.c.l.s4 1966171168
      %v1013 = vunpack.c.0.s8 %v1012
      %v1014 = vlaneseq
      %v1015 = vshrl.u32 %v1014, 7
      %v1016 = vsub.s32 %v1013, %v1015
      %v1017 = vrot.slane %v1003, %v1016
      %v1018 = vcombine.high %v1010, %v1010
      %v1019 = vcombine.high %v1017, %v1017
      %v1021 = vunpack.c.l.s4 1966171168
      %v1022 = vunpack.c.0.s8 %v1021
      %v1023 = vlaneseq
      %v1024 = vshrl.u32 %v1023, 7
      %v1025 = vsub.s32 %v1022, %v1024
      %v1026 = vrot.slane %v1010, %v1025
      %v1028 = vunpack.c.l.s4 1966171168
      %v1029 = vunpack.c.0.s8 %v1028
      %v1030 = vlaneseq
      %v1031 = vshrl.u32 %v1030, 7
      %v1032 = vsub.s32 %v1029, %v1031
      %v1033 = vrot.slane %v1017, %v1032
      %v1035 = vunpack.c.l.s4 1966171168
      %v1036 = vunpack.c.0.s8 %v1035
      %v1037 = vlaneseq
      %v1038 = vshrl.u32 %v1037, 7
      %v1039 = vsub.s32 %v1036, %v1038
      %v1040 = vrot.slane %v1018, %v1039
      %v1042 = vunpack.c.l.s4 1966171168
      %v1043 = vunpack.c.0.s8 %v1042
      %v1044 = vlaneseq
      %v1045 = vshrl.u32 %v1044, 7
      %v1046 = vsub.s32 %v1043, %v1045
      %v1047 = vrot.slane %v1019, %v1046
      %v1048 = vcombine.high %v1026, %v1026
      %v1049 = vcombine.high %v1033, %v1033
      %v1050 = vcombine.high %v1040, %v1040
      %v1051 = vcombine.high %v1047, %v1047
      %v1052 = vlaneseq
      %v1053 = vshrl.u32 %v1052, 7
      %v1054 = vsub.s32 0, %v1053
      %v1055 = vrot.slane %v683, %v1054
      %v1056 = vlaneseq
      %v1057 = vshrl.u32 %v1056, 7
      %v1058 = vsub.s32 0, %v1057
      %v1059 = vrot.slane %v697, %v1058
      %v1060 = vlaneseq
      %v1061 = vshrl.u32 %v1060, 7
      %v1062 = vsub.s32 0, %v1061
      %v1063 = vrot.slane %v705, %v1062
      %v1064 = vlaneseq
      %v1065 = vshrl.u32 %v1064, 7
      %v1066 = vsub.s32 0, %v1065
      %v1067 = vrot.slane %v707, %v1066
      %v1068 = vlaneseq
      %v1069 = vshrl.u32 %v1068, 7
      %v1070 = vsub.s32 0, %v1069
      %v1071 = vrot.slane %v690, %v1070
      %v1072 = vlaneseq
      %v1073 = vshrl.u32 %v1072, 7
      %v1074 = vsub.s32 0, %v1073
      %v1075 = vrot.slane %v704, %v1074
      %v1076 = vlaneseq
      %v1077 = vshrl.u32 %v1076, 7
      %v1078 = vsub.s32 0, %v1077
      %v1079 = vrot.slane %v706, %v1078
      %v1080 = vlaneseq
      %v1081 = vshrl.u32 %v1080, 7
      %v1082 = vsub.s32 0, %v1081
      %v1083 = vrot.slane %v708, %v1082
      %v1084 = vlaneseq
      %v1085 = vshrl.u32 %v1084, 7
      %v1086 = vsub.s32 0, %v1085
      %v1087 = vrot.slane %v732, %v1086
      %v1088 = vlaneseq
      %v1089 = vshrl.u32 %v1088, 7
      %v1090 = vsub.s32 0, %v1089
      %v1091 = vrot.slane %v746, %v1090
      %v1092 = vlaneseq
      %v1093 = vshrl.u32 %v1092, 7
      %v1094 = vsub.s32 0, %v1093
      %v1095 = vrot.slane %v754, %v1094
      %v1096 = vlaneseq
      %v1097 = vshrl.u32 %v1096, 7
      %v1098 = vsub.s32 0, %v1097
      %v1099 = vrot.slane %v756, %v1098
      %v1100 = vlaneseq
      %v1101 = vshrl.u32 %v1100, 7
      %v1102 = vsub.s32 0, %v1101
      %v1103 = vrot.slane %v739, %v1102
      %v1104 = vlaneseq
      %v1105 = vshrl.u32 %v1104, 7
      %v1106 = vsub.s32 0, %v1105
      %v1107 = vrot.slane %v753, %v1106
      %v1108 = vlaneseq
      %v1109 = vshrl.u32 %v1108, 7
      %v1110 = vsub.s32 0, %v1109
      %v1111 = vrot.slane %v755, %v1110
      %v1112 = vlaneseq
      %v1113 = vshrl.u32 %v1112, 7
      %v1114 = vsub.s32 0, %v1113
      %v1115 = vrot.slane %v757, %v1114
      %v1116 = vlaneseq
      %v1117 = vshrl.u32 %v1116, 7
      %v1118 = vsub.s32 0, %v1117
      %v1119 = vrot.slane %v781, %v1118
      %v1120 = vlaneseq
      %v1121 = vshrl.u32 %v1120, 7
      %v1122 = vsub.s32 0, %v1121
      %v1123 = vrot.slane %v795, %v1122
      %v1124 = vlaneseq
      %v1125 = vshrl.u32 %v1124, 7
      %v1126 = vsub.s32 0, %v1125
      %v1127 = vrot.slane %v803, %v1126
      %v1128 = vlaneseq
      %v1129 = vshrl.u32 %v1128, 7
      %v1130 = vsub.s32 0, %v1129
      %v1131 = vrot.slane %v805, %v1130
      %v1132 = vlaneseq
      %v1133 = vshrl.u32 %v1132, 7
      %v1134 = vsub.s32 0, %v1133
      %v1135 = vrot.slane %v788, %v1134
      %v1136 = vlaneseq
      %v1137 = vshrl.u32 %v1136, 7
      %v1138 = vsub.s32 0, %v1137
      %v1139 = vrot.slane %v802, %v1138
      %v1140 = vlaneseq
      %v1141 = vshrl.u32 %v1140, 7
      %v1142 = vsub.s32 0, %v1141
      %v1143 = vrot.slane %v804, %v1142
      %v1144 = vlaneseq
      %v1145 = vshrl.u32 %v1144, 7
      %v1146 = vsub.s32 0, %v1145
      %v1147 = vrot.slane %v806, %v1146
      %v1148 = vlaneseq
      %v1149 = vshrl.u32 %v1148, 7
      %v1150 = vsub.s32 0, %v1149
      %v1151 = vrot.slane %v830, %v1150
      %v1152 = vlaneseq
      %v1153 = vshrl.u32 %v1152, 7
      %v1154 = vsub.s32 0, %v1153
      %v1155 = vrot.slane %v844, %v1154
      %v1156 = vlaneseq
      %v1157 = vshrl.u32 %v1156, 7
      %v1158 = vsub.s32 0, %v1157
      %v1159 = vrot.slane %v852, %v1158
      %v1160 = vlaneseq
      %v1161 = vshrl.u32 %v1160, 7
      %v1162 = vsub.s32 0, %v1161
      %v1163 = vrot.slane %v854, %v1162
      %v1164 = vlaneseq
      %v1165 = vshrl.u32 %v1164, 7
      %v1166 = vsub.s32 0, %v1165
      %v1167 = vrot.slane %v837, %v1166
      %v1168 = vlaneseq
      %v1169 = vshrl.u32 %v1168, 7
      %v1170 = vsub.s32 0, %v1169
      %v1171 = vrot.slane %v851, %v1170
      %v1172 = vlaneseq
      %v1173 = vshrl.u32 %v1172, 7
      %v1174 = vsub.s32 0, %v1173
      %v1175 = vrot.slane %v853, %v1174
      %v1176 = vlaneseq
      %v1177 = vshrl.u32 %v1176, 7
      %v1178 = vsub.s32 0, %v1177
      %v1179 = vrot.slane %v855, %v1178
      %v1180 = vlaneseq
      %v1181 = vshrl.u32 %v1180, 7
      %v1182 = vsub.s32 0, %v1181
      %v1183 = vrot.slane %v879, %v1182
      %v1184 = vlaneseq
      %v1185 = vshrl.u32 %v1184, 7
      %v1186 = vsub.s32 0, %v1185
      %v1187 = vrot.slane %v893, %v1186
      %v1188 = vlaneseq
      %v1189 = vshrl.u32 %v1188, 7
      %v1190 = vsub.s32 0, %v1189
      %v1191 = vrot.slane %v901, %v1190
      %v1192 = vlaneseq
      %v1193 = vshrl.u32 %v1192, 7
      %v1194 = vsub.s32 0, %v1193
      %v1195 = vrot.slane %v903, %v1194
      %v1196 = vlaneseq
      %v1197 = vshrl.u32 %v1196, 7
      %v1198 = vsub.s32 0, %v1197
      %v1199 = vrot.slane %v886, %v1198
      %v1200 = vlaneseq
      %v1201 = vshrl.u32 %v1200, 7
      %v1202 = vsub.s32 0, %v1201
      %v1203 = vrot.slane %v900, %v1202
      %v1204 = vlaneseq
      %v1205 = vshrl.u32 %v1204, 7
      %v1206 = vsub.s32 0, %v1205
      %v1207 = vrot.slane %v902, %v1206
      %v1208 = vlaneseq
      %v1209 = vshrl.u32 %v1208, 7
      %v1210 = vsub.s32 0, %v1209
      %v1211 = vrot.slane %v904, %v1210
      %v1212 = vlaneseq
      %v1213 = vshrl.u32 %v1212, 7
      %v1214 = vsub.s32 0, %v1213
      %v1215 = vrot.slane %v928, %v1214
      %v1216 = vlaneseq
      %v1217 = vshrl.u32 %v1216, 7
      %v1218 = vsub.s32 0, %v1217
      %v1219 = vrot.slane %v942, %v1218
      %v1220 = vlaneseq
      %v1221 = vshrl.u32 %v1220, 7
      %v1222 = vsub.s32 0, %v1221
      %v1223 = vrot.slane %v950, %v1222
      %v1224 = vlaneseq
      %v1225 = vshrl.u32 %v1224, 7
      %v1226 = vsub.s32 0, %v1225
      %v1227 = vrot.slane %v952, %v1226
      %v1228 = vlaneseq
      %v1229 = vshrl.u32 %v1228, 7
      %v1230 = vsub.s32 0, %v1229
      %v1231 = vrot.slane %v935, %v1230
      %v1232 = vlaneseq
      %v1233 = vshrl.u32 %v1232, 7
      %v1234 = vsub.s32 0, %v1233
      %v1235 = vrot.slane %v949, %v1234
      %v1236 = vlaneseq
      %v1237 = vshrl.u32 %v1236, 7
      %v1238 = vsub.s32 0, %v1237
      %v1239 = vrot.slane %v951, %v1238
      %v1240 = vlaneseq
      %v1241 = vshrl.u32 %v1240, 7
      %v1242 = vsub.s32 0, %v1241
      %v1243 = vrot.slane %v953, %v1242
      %v1244 = vlaneseq
      %v1245 = vshrl.u32 %v1244, 7
      %v1246 = vsub.s32 0, %v1245
      %v1247 = vrot.slane %v977, %v1246
      %v1248 = vlaneseq
      %v1249 = vshrl.u32 %v1248, 7
      %v1250 = vsub.s32 0, %v1249
      %v1251 = vrot.slane %v991, %v1250
      %v1252 = vlaneseq
      %v1253 = vshrl.u32 %v1252, 7
      %v1254 = vsub.s32 0, %v1253
      %v1255 = vrot.slane %v999, %v1254
      %v1256 = vlaneseq
      %v1257 = vshrl.u32 %v1256, 7
      %v1258 = vsub.s32 0, %v1257
      %v1259 = vrot.slane %v1001, %v1258
      %v1260 = vlaneseq
      %v1261 = vshrl.u32 %v1260, 7
      %v1262 = vsub.s32 0, %v1261
      %v1263 = vrot.slane %v984, %v1262
      %v1264 = vlaneseq
      %v1265 = vshrl.u32 %v1264, 7
      %v1266 = vsub.s32 0, %v1265
      %v1267 = vrot.slane %v998, %v1266
      %v1268 = vlaneseq
      %v1269 = vshrl.u32 %v1268, 7
      %v1270 = vsub.s32 0, %v1269
      %v1271 = vrot.slane %v1000, %v1270
      %v1272 = vlaneseq
      %v1273 = vshrl.u32 %v1272, 7
      %v1274 = vsub.s32 0, %v1273
      %v1275 = vrot.slane %v1002, %v1274
      %v1276 = vlaneseq
      %v1277 = vshrl.u32 %v1276, 7
      %v1278 = vsub.s32 0, %v1277
      %v1279 = vrot.slane %v1026, %v1278
      %v1280 = vlaneseq
      %v1281 = vshrl.u32 %v1280, 7
      %v1282 = vsub.s32 0, %v1281
      %v1283 = vrot.slane %v1040, %v1282
      %v1284 = vlaneseq
      %v1285 = vshrl.u32 %v1284, 7
      %v1286 = vsub.s32 0, %v1285
      %v1287 = vrot.slane %v1048, %v1286
      %v1288 = vlaneseq
      %v1289 = vshrl.u32 %v1288, 7
      %v1290 = vsub.s32 0, %v1289
      %v1291 = vrot.slane %v1050, %v1290
      %v1292 = vlaneseq
      %v1293 = vshrl.u32 %v1292, 7
      %v1294 = vsub.s32 0, %v1293
      %v1295 = vrot.slane %v1033, %v1294
      %v1296 = vlaneseq
      %v1297 = vshrl.u32 %v1296, 7
      %v1298 = vsub.s32 0, %v1297
      %v1299 = vrot.slane %v1047, %v1298
      %v1300 = vlaneseq
      %v1301 = vshrl.u32 %v1300, 7
      %v1302 = vsub.s32 0, %v1301
      %v1303 = vrot.slane %v1049, %v1302
      %v1304 = vlaneseq
      %v1305 = vshrl.u32 %v1304, 7
      %v1306 = vsub.s32 0, %v1305
      %v1307 = vrot.slane %v1051, %v1306
      %v1308 = vcombine.low %v1055, %v1059
      %v1309 = vcombine.low %v1063, %v1067
      %v1311 = vunpack.c.l.s4 1983009808
      %v1312 = vunpack.c.0.s8 %v1311
      %v1313 = vlaneseq
      %v1314 = vshrl.u32 %v1313, 7
      %v1315 = vsub.s32 %v1312, %v1314
      %v1316 = vrot.slane %v1308, %v1315
      %v1318 = vunpack.c.l.s4 1983009808
      %v1319 = vunpack.c.0.s8 %v1318
      %v1320 = vlaneseq
      %v1321 = vshrl.u32 %v1320, 7
      %v1322 = vsub.s32 %v1319, %v1321
      %v1323 = vrot.slane %v1309, %v1322
      %v1324 = vcombine.low %v1316, %v1323
      %v1325 = vcombine.low %v1071, %v1075
      %v1326 = vcombine.low %v1079, %v1083
      %v1328 = vunpack.c.l.s4 1983009808
      %v1329 = vunpack.c.0.s8 %v1328
      %v1330 = vlaneseq
      %v1331 = vshrl.u32 %v1330, 7
      %v1332 = vsub.s32 %v1329, %v1331
      %v1333 = vrot.slane %v1325, %v1332
      %v1335 = vunpack.c.l.s4 1983009808
      %v1336 = vunpack.c.0.s8 %v1335
      %v1337 = vlaneseq
      %v1338 = vshrl.u32 %v1337, 7
      %v1339 = vsub.s32 %v1336, %v1338
      %v1340 = vrot.slane %v1326, %v1339
      %v1341 = vcombine.low %v1333, %v1340
      %v1342 = vcombine.low %v1087, %v1091
      %v1343 = vcombine.low %v1095, %v1099
      %v1345 = vunpack.c.l.s4 1983009808
      %v1346 = vunpack.c.0.s8 %v1345
      %v1347 = vlaneseq
      %v1348 = vshrl.u32 %v1347, 7
      %v1349 = vsub.s32 %v1346, %v1348
      %v1350 = vrot.slane %v1342, %v1349
      %v1352 = vunpack.c.l.s4 1983009808
      %v1353 = vunpack.c.0.s8 %v1352
      %v1354 = vlaneseq
      %v1355 = vshrl.u32 %v1354, 7
      %v1356 = vsub.s32 %v1353, %v1355
      %v1357 = vrot.slane %v1343, %v1356
      %v1358 = vcombine.low %v1350, %v1357
      %v1359 = vcombine.low %v1103, %v1107
      %v1360 = vcombine.low %v1111, %v1115
      %v1362 = vunpack.c.l.s4 1983009808
      %v1363 = vunpack.c.0.s8 %v1362
      %v1364 = vlaneseq
      %v1365 = vshrl.u32 %v1364, 7
      %v1366 = vsub.s32 %v1363, %v1365
      %v1367 = vrot.slane %v1359, %v1366
      %v1369 = vunpack.c.l.s4 1983009808
      %v1370 = vunpack.c.0.s8 %v1369
      %v1371 = vlaneseq
      %v1372 = vshrl.u32 %v1371, 7
      %v1373 = vsub.s32 %v1370, %v1372
      %v1374 = vrot.slane %v1360, %v1373
      %v1375 = vcombine.low %v1367, %v1374
      %v1376 = vcombine.low %v1119, %v1123
      %v1377 = vcombine.low %v1127, %v1131
      %v1379 = vunpack.c.l.s4 1983009808
      %v1380 = vunpack.c.0.s8 %v1379
      %v1381 = vlaneseq
      %v1382 = vshrl.u32 %v1381, 7
      %v1383 = vsub.s32 %v1380, %v1382
      %v1384 = vrot.slane %v1376, %v1383
      %v1386 = vunpack.c.l.s4 1983009808
      %v1387 = vunpack.c.0.s8 %v1386
      %v1388 = vlaneseq
      %v1389 = vshrl.u32 %v1388, 7
      %v1390 = vsub.s32 %v1387, %v1389
      %v1391 = vrot.slane %v1377, %v1390
      %v1392 = vcombine.low %v1384, %v1391
      %v1393 = vcombine.low %v1135, %v1139
      %v1394 = vcombine.low %v1143, %v1147
      %v1396 = vunpack.c.l.s4 1983009808
      %v1397 = vunpack.c.0.s8 %v1396
      %v1398 = vlaneseq
      %v1399 = vshrl.u32 %v1398, 7
      %v1400 = vsub.s32 %v1397, %v1399
      %v1401 = vrot.slane %v1393, %v1400
      %v1403 = vunpack.c.l.s4 1983009808
      %v1404 = vunpack.c.0.s8 %v1403
      %v1405 = vlaneseq
      %v1406 = vshrl.u32 %v1405, 7
      %v1407 = vsub.s32 %v1404, %v1406
      %v1408 = vrot.slane %v1394, %v1407
      %v1409 = vcombine.low %v1401, %v1408
      %v1410 = vcombine.low %v1151, %v1155
      %v1411 = vcombine.low %v1159, %v1163
      %v1413 = vunpack.c.l.s4 1983009808
      %v1414 = vunpack.c.0.s8 %v1413
      %v1415 = vlaneseq
      %v1416 = vshrl.u32 %v1415, 7
      %v1417 = vsub.s32 %v1414, %v1416
      %v1418 = vrot.slane %v1410, %v1417
      %v1420 = vunpack.c.l.s4 1983009808
      %v1421 = vunpack.c.0.s8 %v1420
      %v1422 = vlaneseq
      %v1423 = vshrl.u32 %v1422, 7
      %v1424 = vsub.s32 %v1421, %v1423
      %v1425 = vrot.slane %v1411, %v1424
      %v1426 = vcombine.low %v1418, %v1425
      %v1427 = vcombine.low %v1167, %v1171
      %v1428 = vcombine.low %v1175, %v1179
      %v1430 = vunpack.c.l.s4 1983009808
      %v1431 = vunpack.c.0.s8 %v1430
      %v1432 = vlaneseq
      %v1433 = vshrl.u32 %v1432, 7
      %v1434 = vsub.s32 %v1431, %v1433
      %v1435 = vrot.slane %v1427, %v1434
      %v1437 = vunpack.c.l.s4 1983009808
      %v1438 = vunpack.c.0.s8 %v1437
      %v1439 = vlaneseq
      %v1440 = vshrl.u32 %v1439, 7
      %v1441 = vsub.s32 %v1438, %v1440
      %v1442 = vrot.slane %v1428, %v1441
      %v1443 = vcombine.low %v1435, %v1442
      %v1444 = vcombine.low %v1183, %v1187
      %v1445 = vcombine.low %v1191, %v1195
      %v1447 = vunpack.c.l.s4 1983009808
      %v1448 = vunpack.c.0.s8 %v1447
      %v1449 = vlaneseq
      %v1450 = vshrl.u32 %v1449, 7
      %v1451 = vsub.s32 %v1448, %v1450
      %v1452 = vrot.slane %v1444, %v1451
      %v1454 = vunpack.c.l.s4 1983009808
      %v1455 = vunpack.c.0.s8 %v1454
      %v1456 = vlaneseq
      %v1457 = vshrl.u32 %v1456, 7
      %v1458 = vsub.s32 %v1455, %v1457
      %v1459 = vrot.slane %v1445, %v1458
      %v1460 = vcombine.low %v1452, %v1459
      %v1461 = vcombine.low %v1199, %v1203
      %v1462 = vcombine.low %v1207, %v1211
      %v1464 = vunpack.c.l.s4 1983009808
      %v1465 = vunpack.c.0.s8 %v1464
      %v1466 = vlaneseq
      %v1467 = vshrl.u32 %v1466, 7
      %v1468 = vsub.s32 %v1465, %v1467
      %v1469 = vrot.slane %v1461, %v1468
      %v1471 = vunpack.c.l.s4 1983009808
      %v1472 = vunpack.c.0.s8 %v1471
      %v1473 = vlaneseq
      %v1474 = vshrl.u32 %v1473, 7
      %v1475 = vsub.s32 %v1472, %v1474
      %v1476 = vrot.slane %v1462, %v1475
      %v1477 = vcombine.low %v1469, %v1476
      %v1478 = vcombine.low %v1215, %v1219
      %v1479 = vcombine.low %v1223, %v1227
      %v1481 = vunpack.c.l.s4 1983009808
      %v1482 = vunpack.c.0.s8 %v1481
      %v1483 = vlaneseq
      %v1484 = vshrl.u32 %v1483, 7
      %v1485 = vsub.s32 %v1482, %v1484
      %v1486 = vrot.slane %v1478, %v1485
      %v1488 = vunpack.c.l.s4 1983009808
      %v1489 = vunpack.c.0.s8 %v1488
      %v1490 = vlaneseq
      %v1491 = vshrl.u32 %v1490, 7
      %v1492 = vsub.s32 %v1489, %v1491
      %v1493 = vrot.slane %v1479, %v1492
      %v1494 = vcombine.low %v1486, %v1493
      %v1495 = vcombine.low %v1231, %v1235
      %v1496 = vcombine.low %v1239, %v1243
      %v1498 = vunpack.c.l.s4 1983009808
      %v1499 = vunpack.c.0.s8 %v1498
      %v1500 = vlaneseq
      %v1501 = vshrl.u32 %v1500, 7
      %v1502 = vsub.s32 %v1499, %v1501
      %v1503 = vrot.slane %v1495, %v1502
      %v1505 = vunpack.c.l.s4 1983009808
      %v1506 = vunpack.c.0.s8 %v1505
      %v1507 = vlaneseq
      %v1508 = vshrl.u32 %v1507, 7
      %v1509 = vsub.s32 %v1506, %v1508
      %v1510 = vrot.slane %v1496, %v1509
      %v1511 = vcombine.low %v1503, %v1510
      %v1512 = vcombine.low %v1247, %v1251
      %v1513 = vcombine.low %v1255, %v1259
      %v1515 = vunpack.c.l.s4 1983009808
      %v1516 = vunpack.c.0.s8 %v1515
      %v1517 = vlaneseq
      %v1518 = vshrl.u32 %v1517, 7
      %v1519 = vsub.s32 %v1516, %v1518
      %v1520 = vrot.slane %v1512, %v1519
      %v1522 = vunpack.c.l.s4 1983009808
      %v1523 = vunpack.c.0.s8 %v1522
      %v1524 = vlaneseq
      %v1525 = vshrl.u32 %v1524, 7
      %v1526 = vsub.s32 %v1523, %v1525
      %v1527 = vrot.slane %v1513, %v1526
      %v1528 = vcombine.low %v1520, %v1527
      %v1529 = vcombine.low %v1263, %v1267
      %v1530 = vcombine.low %v1271, %v1275
      %v1532 = vunpack.c.l.s4 1983009808
      %v1533 = vunpack.c.0.s8 %v1532
      %v1534 = vlaneseq
      %v1535 = vshrl.u32 %v1534, 7
      %v1536 = vsub.s32 %v1533, %v1535
      %v1537 = vrot.slane %v1529, %v1536
      %v1539 = vunpack.c.l.s4 1983009808
      %v1540 = vunpack.c.0.s8 %v1539
      %v1541 = vlaneseq
      %v1542 = vshrl.u32 %v1541, 7
      %v1543 = vsub.s32 %v1540, %v1542
      %v1544 = vrot.slane %v1530, %v1543
      %v1545 = vcombine.low %v1537, %v1544
      %v1546 = vcombine.low %v1279, %v1283
      %v1547 = vcombine.low %v1287, %v1291
      %v1549 = vunpack.c.l.s4 1983009808
      %v1550 = vunpack.c.0.s8 %v1549
      %v1551 = vlaneseq
      %v1552 = vshrl.u32 %v1551, 7
      %v1553 = vsub.s32 %v1550, %v1552
      %v1554 = vrot.slane %v1546, %v1553
      %v1556 = vunpack.c.l.s4 1983009808
      %v1557 = vunpack.c.0.s8 %v1556
      %v1558 = vlaneseq
      %v1559 = vshrl.u32 %v1558, 7
      %v1560 = vsub.s32 %v1557, %v1559
      %v1561 = vrot.slane %v1547, %v1560
      %v1562 = vcombine.low %v1554, %v1561
      %v1563 = vcombine.low %v1295, %v1299
      %v1564 = vcombine.low %v1303, %v1307
      %v1566 = vunpack.c.l.s4 1983009808
      %v1567 = vunpack.c.0.s8 %v1566
      %v1568 = vlaneseq
      %v1569 = vshrl.u32 %v1568, 7
      %v1570 = vsub.s32 %v1567, %v1569
      %v1571 = vrot.slane %v1563, %v1570
      %v1573 = vunpack.c.l.s4 1983009808
      %v1574 = vunpack.c.0.s8 %v1573
      %v1575 = vlaneseq
      %v1576 = vshrl.u32 %v1575, 7
      %v1577 = vsub.s32 %v1574, %v1576
      %v1578 = vrot.slane %v1564, %v1577
      %v1579 = vcombine.low %v1571, %v1578
      %v1596 = vadd.f32 %v486, %v1324
      %v1597 = vadd.f32 %v491, %v1341
      %v1598 = vadd.f32 %v496, %v1324
      %v1599 = vadd.f32 %v501, %v1341
      %v1600 = vadd.f32 %v506, %v1358
      %v1601 = vadd.f32 %v511, %v1375
      %v1602 = vadd.f32 %v516, %v1358
      %v1603 = vadd.f32 %v521, %v1375
      %v1604 = vadd.f32 %v526, %v1392
      %v1605 = vadd.f32 %v531, %v1409
      %v1606 = vadd.f32 %v536, %v1392
      %v1607 = vadd.f32 %v541, %v1409
      %v1608 = vadd.f32 %v546, %v1426
      %v1609 = vadd.f32 %v551, %v1443
      %v1610 = vadd.f32 %v556, %v1426
      %v1611 = vadd.f32 %v561, %v1443
      %v1612 = vadd.f32 %v566, %v1460
      %v1613 = vadd.f32 %v571, %v1477
      %v1614 = vadd.f32 %v576, %v1460
      %v1615 = vadd.f32 %v581, %v1477
      %v1616 = vadd.f32 %v586, %v1494
      %v1617 = vadd.f32 %v591, %v1511
      %v1618 = vadd.f32 %v596, %v1494
      %v1619 = vadd.f32 %v601, %v1511
      %v1620 = vadd.f32 %v606, %v1528
      %v1621 = vadd.f32 %v611, %v1545
      %v1622 = vadd.f32 %v616, %v1528
      %v1623 = vadd.f32 %v621, %v1545
      %v1624 = vadd.f32 %v626, %v1562
      %v1625 = vadd.f32 %v631, %v1579
      %v1626 = vadd.f32 %v636, %v1562
      %v1627 = vadd.f32 %v641, %v1579
      %vm1628 = vcmask 64512
      %1629 = vst.msk [vmem:[%s276] sm:$0xff] %vm1628, %v1596
      %1630 = vst.msk [vmem:[%s276 + $0x8] sm:$0xff] %vm1628, %v1597
      %1631 = vst.msk [vmem:[%s276 + $0x10] sm:$0xff] %vm1628, %v1598
      %1632 = vst.msk [vmem:[%s276 + $0x18] sm:$0xff] %vm1628, %v1599
      %1633 = vst.msk [vmem:[%s276 + $0x20] sm:$0xff] %vm1628, %v1600
      %1634 = vst.msk [vmem:[%s276 + $0x28] sm:$0xff] %vm1628, %v1601
      %1635 = vst.msk [vmem:[%s276 + $0x30] sm:$0xff] %vm1628, %v1602
      %1636 = vst.msk [vmem:[%s276 + $0x38] sm:$0xff] %vm1628, %v1603
      %1637 = vst.msk [vmem:[%s276 + $0x40] sm:$0xff] %vm1628, %v1604
      %1638 = vst.msk [vmem:[%s276 + $0x48] sm:$0xff] %vm1628, %v1605
      %1639 = vst.msk [vmem:[%s276 + $0x50] sm:$0xff] %vm1628, %v1606
      %1640 = vst.msk [vmem:[%s276 + $0x58] sm:$0xff] %vm1628, %v1607
      %1641 = vst.msk [vmem:[%s276 + $0x60] sm:$0xff] %vm1628, %v1608
      %1642 = vst.msk [vmem:[%s276 + $0x68] sm:$0xff] %vm1628, %v1609
      %1643 = vst.msk [vmem:[%s276 + $0x70] sm:$0xff] %vm1628, %v1610
      %1644 = vst.msk [vmem:[%s276 + $0x78] sm:$0xff] %vm1628, %v1611
      %1645 = vst.msk [vmem:[%s276 + $0x80] sm:$0xff] %vm1628, %v1612
      %1646 = vst.msk [vmem:[%s276 + $0x88] sm:$0xff] %vm1628, %v1613
      %1647 = vst.msk [vmem:[%s276 + $0x90] sm:$0xff] %vm1628, %v1614
      %1648 = vst.msk [vmem:[%s276 + $0x98] sm:$0xff] %vm1628, %v1615
      %1649 = vst.msk [vmem:[%s276 + $0xa0] sm:$0xff] %vm1628, %v1616
      %1650 = vst.msk [vmem:[%s276 + $0xa8] sm:$0xff] %vm1628, %v1617
      %1651 = vst.msk [vmem:[%s276 + $0xb0] sm:$0xff] %vm1628, %v1618
      %1652 = vst.msk [vmem:[%s276 + $0xb8] sm:$0xff] %vm1628, %v1619
      %1653 = vst.msk [vmem:[%s276 + $0xc0] sm:$0xff] %vm1628, %v1620
      %1654 = vst.msk [vmem:[%s276 + $0xc8] sm:$0xff] %vm1628, %v1621
      %1655 = vst.msk [vmem:[%s276 + $0xd0] sm:$0xff] %vm1628, %v1622
      %1656 = vst.msk [vmem:[%s276 + $0xd8] sm:$0xff] %vm1628, %v1623
      %1657 = vst.msk [vmem:[%s276 + $0xe0] sm:$0xff] %vm1628, %v1624
      %1658 = vst.msk [vmem:[%s276 + $0xe8] sm:$0xff] %vm1628, %v1625
      %1659 = vst.msk [vmem:[%s276 + $0xf0] sm:$0xff] %vm1628, %v1626
      %1660 = vst.msk [vmem:[%s276 + $0xf8] sm:$0xff] %vm1628, %v1627
      %s1661 = smul.u32 16, %s20
      %p1662 = scmp.lt.s32.totalorder %s19, 1
      %s1663 = scalar_select %p1662, %s19, 1
      %p1664 = scmp.lt.s32.totalorder %s1661, 15
      %s1665 = scalar_select %p1664, %s1661, 15
      %s1666 = smul.addr %s1665, 2
      %s1667 = smul.addr %s1663, 32
      %s1668 = sadd.s32 %s1666, %s1667
      %s1669 = smul.addr %s1668, 8
      %s1670 = scalar_lea.vmem %s4, %s1669
      // Predicated region
      $region37: #{fpn_block_forward.1} parent=35 // pred_check
        %p1671 = pneg %p145
      $region38: #{fpn_block_forward.1} parent=35 // pred_check_branch
        %1673 = sbr.rel (%p1671) target = $region40
      $region39: #{fpn_block_forward.1} parent=35 // pred_region
        %s1674 = smul.u32 16, %s20
      $region40: #{fpn_block_forward.1} parent=35 // pred_fallthru
        _
    $region36: #{fpn_block_forward.1} parent=5 // pred_fallthru
      _
    %p1675 = scmp.le.s32.totalorder 2, %s10
    // Predicated region
    $region41: #{fpn_block_forward.1} parent=5 // pred_check
      %p1676 = pneg %p1675
    $region42: #{fpn_block_forward.1} parent=5 // pred_check_branch
      %1678 = sbr.rel (%p1676) target = $region44
    $region43: #{fpn_block_forward.1} parent=5 // pred_region
      %s1679 = ssub.s32 %s10, 2
      // Predicated region
      $region45: #{fpn_block_forward.1} parent=43 // pred_check
        %p1680 = pneg %p151
      $region46: #{fpn_block_forward.1} parent=43 // pred_check_branch
        %1682 = sbr.rel (%p1680) target = $region48
      $region47: #{fpn_block_forward.1} parent=43 // pred_region
        %s1683 = smul.u32 16, %s22
        %p1684 = scmp.lt.s32.totalorder %s21, 1
        %s1685 = scalar_select %p1684, %s21, 1
        %p1686 = scmp.lt.s32.totalorder %s1683, 15
        %s1687 = scalar_select %p1686, %s1683, 15
        %s1688 = smul.addr %s1687, 2
        %s1689 = smul.addr %s1685, 32
        %s1690 = sadd.s32 %s1688, %s1689
        %s1691 = smul.addr %s1690, 8
        %s1692 = scalar_lea.vmem %s4, %s1691
      $region48: #{fpn_block_forward.1} parent=43 // pred_fallthru
        _
    $region44: #{fpn_block_forward.1} parent=5 // pred_fallthru
      _
  $region6: #{fpn_block_forward.1} parent=0 // loop_footer
    %s14 = sadd.s32 1, %s10
  $region7: #{fpn_block_forward.1} parent=0 // loop_footer_branch
    %9 = sbr.rel target = $region3
  $region8: #{fpn_block_forward.1} parent=0 // loop_exit
    _

</llo_original>
